<compile_context>
chip_gen: v7x
topology: tpu7x:2x2x1
jax: 0.10.0
libtpu: 0.0.40
codegen_flags: <defaults>
</compile_context>

<pallas_src>
import jax
import jax.numpy as jnp
from jax.experimental import pallas as pl
from jax.experimental.pallas import tpu as pltpu


def _make_coefficient_net_kernel(tk: int, f: int):
    """Builds the kernel with static K-tile size (tk) and total features (f)."""
    rem = f % tk  # nonzero only when the last K tile is partial

    def kernel(x_ref, w_ref, o_ref, acc_ref):
        k = pl.program_id(1)
        nk = pl.num_programs(1)

        @pl.when(k == 0)
        def _():
            acc_ref[...] = jnp.zeros_like(acc_ref)

        # VPU multiply (broadcast (1, TK) weight over TM rows) + lane reduce.
        xw = x_ref[...].astype(jnp.float32) * w_ref[...].astype(jnp.float32)
        if rem != 0:
            # Last K tile is partial: zero contributions from padded lanes.
            lane = jax.lax.broadcasted_iota(jnp.int32, xw.shape, 1)
            valid = jnp.where(k == nk - 1, rem, tk)
            xw = jnp.where(lane < valid, xw, 0.0)
        acc_ref[...] += jnp.sum(xw, axis=-1, keepdims=True)

        @pl.when(k == nk - 1)
        def _():
            o_ref[...] = acc_ref[...].astype(o_ref.dtype)

    return kernel


def coefficient_net_forward(
    x: jax.Array, weight: jax.Array, *, tm_max: int = 512, tk_max: int = 2048
) -> jax.Array:
    """x: (B, F); weight: (1, F) (PyTorch Linear layout). Returns x @ weight.T."""
    assert tm_max % 8 == 0 and tk_max % 128 == 0
    B, F = x.shape
    assert weight.shape == (1, F)

    # Batch tile: whole array when small, otherwise a multiple-of-8 tile.
    TM = B if B <= tm_max else tm_max
    # Feature (reduction) tile: whole array when small, else multiple of 128.
    TK = F if F <= tk_max else tk_max

    nb = pl.cdiv(B, TM)
    nk = pl.cdiv(F, TK)

    itemsize = jnp.dtype(x.dtype).itemsize
    # Double-buffered x / weight / output tiles + f32 accumulator scratch
    # (weight sublane-pads to 8 rows, output lane-pads to 128 cols in VMEM).
    vmem_need = (
        2 * TM * TK * itemsize
        + 2 * 8 * TK * itemsize
        + 2 * TM * 128 * 4
        + TM * 128 * 4
    )
    vmem_limit = int(vmem_need + (4 << 20))  # headroom

    cost = pl.CostEstimate(
        flops=2 * B * F,
        transcendentals=0,
        bytes_accessed=B * F * itemsize + F * itemsize + B * itemsize,
    )

    kernel = _make_coefficient_net_kernel(TK, F)

    return pl.pallas_call(
        kernel,
        out_shape=jax.ShapeDtypeStruct((B, 1), x.dtype),
        grid_spec=pltpu.PrefetchScalarGridSpec(
            num_scalar_prefetch=0,
            grid=(nb, nk),
            in_specs=[
                pl.BlockSpec((TM, TK), lambda i, k: (i, k)),
                pl.BlockSpec((1, TK), lambda i, k: (0, k)),
            ],
            out_specs=pl.BlockSpec((TM, 1), lambda i, k: (i, 0)),
            scratch_shapes=[pltpu.VMEM((TM, 1), jnp.float32)],
        ),
        compiler_params=pltpu.CompilerParams(
            dimension_semantics=("parallel", "arbitrary"),
            vmem_limit_bytes=vmem_limit,
        ),
        cost_estimate=cost,
    )(x, weight)


if __name__ == "__main__":
    key = jax.random.PRNGKey(0)

    # --- Small case matching CoefficientNet defaults -------------------------
    in_features = 4
    batch = 8
    weight = jnp.full((1, in_features), 0.01, dtype=jnp.float32)  # fill_(0.01)
    x = jax.random.normal(key, (batch, in_features), dtype=jnp.float32)

    y = jax.block_until_ready(coefficient_net_forward(x, weight))
    y_ref = x @ weight.T
    assert y.shape == (batch, 1)
    assert jnp.allclose(y, y_ref, atol=1e-6, rtol=1e-6)

    # --- Larger case exercising batch tiling, F tiling, and partial tiles ----
    B2, F2 = 1037, 2500
    w2 = jnp.full((1, F2), 0.01, dtype=jnp.float32)
    x2 = jax.random.normal(jax.random.PRNGKey(1), (B2, F2), dtype=jnp.float32)

    y2 = jax.block_until_ready(
        coefficient_net_forward(x2, w2, tm_max=256, tk_max=1024)
    )
    y2_ref = x2 @ w2.T
    assert y2.shape == (B2, 1)
    assert jnp.allclose(y2, y2_ref, atol=1e-4, rtol=1e-4)

    print("KERNEL_OK")
</pallas_src>

<mosaic_0001>
module attributes {stable_mosaic.version = 11 : i64} {
  func.func @kernel(%arg0: i32, %arg1: i32, %arg2: memref<8x4xf32, #tpu.memory_space<vmem>>, %arg3: memref<1x4xf32, #tpu.memory_space<vmem>>, %arg4: memref<8x1xf32, #tpu.memory_space<vmem>>, %arg5: memref<8x1xf32, #tpu.memory_space<vmem>>) attributes {dimension_semantics = [#tpu.dimension_semantics<parallel>, #tpu.dimension_semantics<arbitrary>], iteration_bounds = array<i64: 1, 1>, scalar_prefetch = 0 : i64, scratch_operands = 1 : i64, tpu.core_type = #tpu.core_type<tc>, window_params = [{transform_indices = @transform_0, window_bounds = array<i64: 8, 4>}, {transform_indices = @transform_1, window_bounds = array<i64: 1, 4>}, {transform_indices = @transform_2, window_bounds = array<i64: 8, 1>}]} {
    %c0_i32 = arith.constant 0 : i32
    %0 = arith.cmpi eq, %arg1, %c0_i32 : i32
    %1 = arith.extui %0 : i1 to i32
    %c0_i32_0 = arith.constant 0 : i32
    %2 = arith.cmpi ne, %1, %c0_i32_0 : i32
    scf.if %2 {
      %cst_10 = arith.constant 0.000000e+00 : f32
      %15 = vector.broadcast %cst_10 : f32 to vector<8x1xf32>
      %c0_11 = arith.constant 0 : index
      %c0_12 = arith.constant 0 : index
      %16 = vector.load %arg5[%c0_11, %c0_12] : memref<8x1xf32, #tpu.memory_space<vmem>>, vector<8x1xf32>
      tpu.vector_store %arg5[%c0_11, %c0_12], %15 {strides = array<i32>} : memref<8x1xf32, #tpu.memory_space<vmem>>, vector<8x1xf32>,
    } else {
    }
    %c0 = arith.constant 0 : index
    %c0_1 = arith.constant 0 : index
    %3 = vector.load %arg2[%c0, %c0_1] : memref<8x4xf32, #tpu.memory_space<vmem>>, vector<8x4xf32>
    %c0_2 = arith.constant 0 : index
    %c0_3 = arith.constant 0 : index
    %4 = vector.load %arg3[%c0_2, %c0_3] : memref<1x4xf32, #tpu.memory_space<vmem>>, vector<1x4xf32>
    %5 = vector.broadcast %4 : vector<1x4xf32> to vector<8x4xf32>
    %6 = arith.mulf %3, %5 : vector<8x4xf32>
    %c0_4 = arith.constant 0 : index
    %c0_5 = arith.constant 0 : index
    %7 = vector.load %arg5[%c0_4, %c0_5] : memref<8x1xf32, #tpu.memory_space<vmem>>, vector<8x1xf32>
    %cst = arith.constant dense<0.000000e+00> : vector<8xf32>
    %8 = vector.multi_reduction <add>, %6, %cst [1] : vector<8x4xf32> to vector<8xf32>
    %9 = vector.shape_cast %8 : vector<8xf32> to vector<8x1xf32>
    %10 = arith.addf %7, %9 : vector<8x1xf32>
    %c0_6 = arith.constant 0 : index
    %c0_7 = arith.constant 0 : index
    %11 = vector.load %arg5[%c0_6, %c0_7] : memref<8x1xf32, #tpu.memory_space<vmem>>, vector<8x1xf32>
    tpu.vector_store %arg5[%c0_6, %c0_7], %10 {strides = array<i32>} : memref<8x1xf32, #tpu.memory_space<vmem>>, vector<8x1xf32>,
    %c0_i32_8 = arith.constant 0 : i32
    %12 = arith.cmpi eq, %arg1, %c0_i32_8 : i32
    %13 = arith.extui %12 : i1 to i32
    %c0_i32_9 = arith.constant 0 : i32
    %14 = arith.cmpi ne, %13, %c0_i32_9 : i32
    scf.if %14 {
      %c0_10 = arith.constant 0 : index
      %c0_11 = arith.constant 0 : index
      %15 = vector.load %arg5[%c0_10, %c0_11] : memref<8x1xf32, #tpu.memory_space<vmem>>, vector<8x1xf32>
      %c0_12 = arith.constant 0 : index
      %c0_13 = arith.constant 0 : index
      %16 = vector.load %arg4[%c0_12, %c0_13] : memref<8x1xf32, #tpu.memory_space<vmem>>, vector<8x1xf32>
      tpu.vector_store %arg4[%c0_12, %c0_13], %15 {strides = array<i32>} : memref<8x1xf32, #tpu.memory_space<vmem>>, vector<8x1xf32>,
    } else {
    }
    return
  }
  func.func @transform_0(%arg0: i32, %arg1: i32) -> (i32, i32) {
    %c0_i32 = arith.constant 0 : i32
    return %arg0, %arg1 : i32, i32
  }
  func.func @transform_1(%arg0: i32, %arg1: i32) -> (i32, i32) {
    %c0_i32 = arith.constant 0 : i32
    %c0_i32_0 = arith.constant 0 : i32
    return %c0_i32, %arg1 : i32, i32
  }
  func.func @transform_2(%arg0: i32, %arg1: i32) -> (i32, i32) {
    %c0_i32 = arith.constant 0 : i32
    %c0_i32_0 = arith.constant 0 : i32
    return %arg0, %c0_i32 : i32, i32
  }
}

</mosaic_0001>

<llo_original>
// kernel: tpu_custom_call.1
$region0: #{tpu_custom_call.1}
  #allocation0 [shape = 'u32[]', space=smem, size = 0x4, offset = 0x4, fixed_abs, tag = 'smem constant byte address 0x4 - core index']
  #allocation1 [shape = 'u32[144,128]{1,0:T(1,128)}', space=vmem, size = 0x12000, scoped, tag = 'internal scratch']
  #allocation2 [shape = 'f32[8,1]{1,0:T(8,128)}', space=vmem, size = 0x1000, scoped, tag = 'scratch operand']
  %s0 = inlined_call_operand.vmem [shape: f32[8,4], index: 0, kind: input, shape index: {}]
  %s1 = inlined_call_operand.vmem [shape: f32[1,4], index: 1, kind: input, shape index: {}]
  %s2 = inlined_call_operand.vmem [shape: f32[8,1], index: 2, kind: output, shape index: {}]
  %s3 = sld [smem:[#allocation0]]
  $region26: #{tpu_custom_call.1} parent=0
    _
  %s5 = ssub.s32 1, %s3
  %s6 = scalar_select 0, %s5, %s3
  // Predicated region
  $region2: #{tpu_custom_call.1} parent=0 // pred_check
    _
  $region3: #{tpu_custom_call.1} parent=0 // pred_check_branch
    %8 = sbr.rel (0) target = $region5
  $region4: #{tpu_custom_call.1} parent=0 // pred_region
    _
  $region5: #{tpu_custom_call.1} parent=0 // pred_fallthru
    _
  // Predicated region
  $region6: #{tpu_custom_call.1} parent=0 // pred_check
    _
  $region7: #{tpu_custom_call.1} parent=0 // pred_check_branch
    %10 = sbr.rel (0) target = $region9
  $region8: #{tpu_custom_call.1} parent=0 // pred_region
    _
  $region9: #{tpu_custom_call.1} parent=0 // pred_fallthru
    _
  %p11 = scmp.eq.s32.totalorder 0, 0
  // Predicated region
  $region10: #{tpu_custom_call.1} parent=0 // pred_check
    %p12 = pneg %p11
  $region11: #{tpu_custom_call.1} parent=0 // pred_check_branch
    %14 = sbr.rel (%p12) target = $region13
  $region12: #{tpu_custom_call.1} parent=0 // pred_region
    %vm15 = vcmask 7168
    %16 = vst.msk [vmem:[#allocation2] sm:$0xff] %vm15, 0.0
  $region13: #{tpu_custom_call.1} parent=0 // pred_fallthru
    _
  %v17 = vld [vmem:[%s0] sm:$0xff]
  %v18 = vld [vmem:[%s1] sm:$0x1]
  %v20 = vlaneseq
  %v21 = vshrl.u32 %v20, 7
  %v22 = vsub.s32 0, %v21
  %v23 = vrot.slane %v18, %v22
  %v25 = vmul.f32 %v17, %v23
  %v26 = vld [vmem:[#allocation2] sm:$0xff]
  %vm27 = vcmask 31744
  %v28 = vsel %vm27, %v25, 0.0
  %29 = vadd.xlane.f32.xlu0 %v28
  %v30 = vpop.xlane.xlu0 %29
  %v31 = vadd.f32 %v26, %v30
  %vm32 = vcmask 7168
  %33 = vst.msk [vmem:[#allocation2] sm:$0xff] %vm32, %v31
  // Predicated region
  $region14: #{tpu_custom_call.1} parent=0 // pred_check
    %p34 = pneg %p11
  $region15: #{tpu_custom_call.1} parent=0 // pred_check_branch
    %36 = sbr.rel (%p34) target = $region17
  $region16: #{tpu_custom_call.1} parent=0 // pred_region
    %v37 = vld [vmem:[#allocation2] sm:$0xff]
    %38 = vst.msk [vmem:[%s2] sm:$0xff] %vm32, %v37
  $region17: #{tpu_custom_call.1} parent=0 // pred_fallthru
    _
  // Predicated region
  $region18: #{tpu_custom_call.1} parent=0 // pred_check
    _
  $region19: #{tpu_custom_call.1} parent=0 // pred_check_branch
    %40 = sbr.rel (0) target = $region21
  $region20: #{tpu_custom_call.1} parent=0 // pred_region
    _
  $region21: #{tpu_custom_call.1} parent=0 // pred_fallthru
    _
  // Predicated region
  $region22: #{tpu_custom_call.1} parent=0 // pred_check
    _
  $region23: #{tpu_custom_call.1} parent=0 // pred_check_branch
    %42 = sbr.rel (0) target = $region25
  $region24: #{tpu_custom_call.1} parent=0 // pred_region
    _
  $region25: #{tpu_custom_call.1} parent=0 // pred_fallthru
    _

</llo_original>
